<compile_context>
chip_gen: v7x
topology: tpu7x:2x2x1
jax: 0.10.0
libtpu: 0.0.40
codegen_flags: <defaults>
</compile_context>

<pallas_src>
import math
import random

import jax
import jax.numpy as jnp
from jax.experimental import pallas as pl
from jax.experimental.pallas import tpu as pltpu


# ---------------------------------------------------------------------------
# get_params: mirrors GroupRandomResizedCrop.get_params.
# Pure Python RNG -> no blocking device reads inside the rejection loop.
# ---------------------------------------------------------------------------
def get_params(seed, height, width, scale=(0.08, 1.0), ratio=(3.0 / 4.0, 4.0 / 3.0)):
    rng = random.Random(seed)
    area = height * width
    log_ratio = (math.log(ratio[0]), math.log(ratio[1]))
    for _ in range(10):
        target_area = area * rng.uniform(scale[0], scale[1])
        aspect_ratio = math.exp(rng.uniform(log_ratio[0], log_ratio[1]))
        w = int(round(math.sqrt(target_area * aspect_ratio)))
        h = int(round(math.sqrt(target_area / aspect_ratio)))
        if 0 < w <= width and 0 < h <= height:
            i = rng.randint(0, height - h)   # inclusive upper bound
            j = rng.randint(0, width - w)
            return i, j, h, w
    # fallback: central crop
    in_ratio = float(width) / float(height)
    if in_ratio < min(ratio):
        w = width
        h = int(round(w / min(ratio)))
    elif in_ratio > max(ratio):
        h = height
        w = int(round(h * max(ratio)))
    else:
        w = width
        h = height
    i = (height - h) // 2
    j = (width - w) // 2
    return i, j, h, w


# ---------------------------------------------------------------------------
# Compact bilinear interpolation weights (align_corners=False, no antialias).
# Rows: output pixel; Cols: pixel inside the crop window.
# ---------------------------------------------------------------------------
def _bilinear_weight_matrix(out_size, crop_len):
    o = jnp.arange(out_size, dtype=jnp.float32)
    scale = float(crop_len) / float(out_size)
    src = jnp.clip((o + 0.5) * scale - 0.5, 0.0, float(crop_len - 1))
    lo = jnp.floor(src)
    frac = src - lo
    lo_i = lo.astype(jnp.int32)
    hi_i = jnp.minimum(lo_i + 1, crop_len - 1)        # replicate crop edge
    rows = jnp.arange(out_size)
    W = jnp.zeros((out_size, crop_len), jnp.float32)
    W = W.at[rows, lo_i].add(1.0 - frac)
    W = W.at[rows, hi_i].add(frac)
    return W


# ---------------------------------------------------------------------------
# Plane-batch selection: biggest divisor of NC that (a) fits a conservative
# VMEM budget (works on v7x's 64 MiB as well as v5e/v6e) and (b) keeps the
# grid length >= 2 so both v7x TensorCores get work.
# ---------------------------------------------------------------------------
def _choose_plane_block(nc, hp, w, oh, ow, budget_bytes):
    per_plane = 2 * (hp * w * 2 + oh * ow * 4) + hp * ow * 4  # dbl-buf io + f32 mid
    best = 1
    for b in range(1, nc + 1):
        if nc % b:
            continue
        if b * per_plane > budget_bytes:
            continue
        if nc > 1 and nc // b < 2:
            continue
        best = b
    return best


# ---------------------------------------------------------------------------
# Pallas kernel: B cropped planes -> B resized planes per grid step.
# ---------------------------------------------------------------------------
def _resize_group_kernel(img_ref, wxt_ref, wy_ref, out_ref):
    # img_ref : (B, hp, w)   bf16  zero-padded crops
    # wxt_ref : (w, OW)      bf16  width-axis bilinear weights (transposed)
    # wy_ref  : (OH, hp)     bf16  height-axis bilinear weights
    # out_ref : (B, OH, OW)  output dtype
    B, hp, w = img_ref.shape
    OW = wxt_ref.shape[1]

    # Width pass: single flattened matmul -> MXU sees M = B*hp (large).
    x = img_ref[...].reshape(B * hp, w)
    t = jnp.dot(x, wxt_ref[...], preferred_element_type=jnp.float32)   # (B*hp, OW)
    t = t.reshape(B, hp, OW).astype(wy_ref.dtype)

    # Height pass: short static loop of 2-D matmuls (B is a small constant).
    wy = wy_ref[...]
    for b in range(B):
        out_ref[b] = jnp.dot(wy, t[b],
                             preferred_element_type=jnp.float32).astype(out_ref.dtype)


def resized_crop_group(img_group, i, j, h, w, size, *,
                       compute_dtype=jnp.bfloat16,
                       vmem_budget_bytes=20 * 1024 * 1024):
    """img_group: (N, C, H, W) -> (N, C, size, size), crop+bilinear resize."""
    N, C, H, W = img_group.shape
    OH = OW = size
    NC = N * C

    # Static crop: the kernel never touches pixels outside [i:i+h, j:j+w].
    crop = img_group[:, :, i:i + h, j:j + w].reshape(NC, h, w)

    # Pad crop rows to a multiple of 16 so the in-kernel (B, hp, w)->(B*hp, w)
    # reshape is tile-aligned for bf16 (sublane packing = 16).
    hp = -(-h // 16) * 16
    if hp != h:
        crop = jnp.pad(crop, ((0, 0), (0, hp - h), (0, 0)))
    crop = crop.astype(compute_dtype)

    wy = _bilinear_weight_matrix(OH, h)                            # (OH, h)
    if hp != h:
        wy = jnp.pad(wy, ((0, 0), (0, hp - h)))                    # zero weight on pad
    wy = wy.astype(compute_dtype)
    wxt = _bilinear_weight_matrix(OW, w).T.astype(compute_dtype)   # (w, OW)

    B = _choose_plane_block(NC, hp, w, OH, OW, vmem_budget_bytes)
    grid = (NC // B,)

    out = pl.pallas_call(
        _resize_group_kernel,
        out_shape=jax.ShapeDtypeStruct((NC, OH, OW), img_group.dtype),
        grid_spec=pltpu.PrefetchScalarGridSpec(
            num_scalar_prefetch=0,
            grid=grid,
            in_specs=[
                pl.BlockSpec((B, hp, w), lambda n: (n, 0, 0)),
                # Constant index_map -> fetched once; tiny, so double-buffer
                # overhead is negligible.
                pl.BlockSpec((w, OW), lambda n: (0, 0)),
                pl.BlockSpec((OH, hp), lambda n: (0, 0)),
            ],
            out_specs=pl.BlockSpec((B, OH, OW), lambda n: (n, 0, 0)),
        ),
        compiler_params=pltpu.CompilerParams(
            dimension_semantics=("parallel",),
            vmem_limit_bytes=32 * 1024 * 1024,
        ),
    )(crop, wxt, wy)

    return out.reshape(N, C, OH, OW)


class GroupRandomResizedCrop:
    def __init__(self, size, scale=(0.08, 1.0), ratio=(3.0 / 4.0, 4.0 / 3.0)):
        self.size = size
        self.scale = scale
        self.ratio = ratio

    def __call__(self, img_group, seed=0):
        # img_group: (N, C, H, W); one crop window applied to every image.
        _, _, H, W = img_group.shape
        i, j, h, w = get_params(seed, H, W, self.scale, self.ratio)
        # NOTE: i, j, h, w are static Python ints -> each distinct crop shape
        # specializes the kernel; bucket crop sizes if recompiles matter.
        return resized_crop_group(img_group, i, j, h, w, self.size)


# ---------------------------------------------------------------------------
# Pure-JAX f32 reference (same math) for a sanity check.
# ---------------------------------------------------------------------------
def _reference(img_group, i, j, h, w, size):
    crop = img_group[:, :, i:i + h, j:j + w].astype(jnp.float32)
    wy = _bilinear_weight_matrix(size, h)
    wx = _bilinear_weight_matrix(size, w)
    return jnp.einsum('oh,nchw,pw->ncop', wy, crop, wx)


if __name__ == "__main__":
    key = jax.random.PRNGKey(0)
    N, C, H, W = 2, 4, 16, 16
    size = 8
    img_group = jax.random.normal(key, (N, C, H, W), dtype=jnp.float32)

    module = GroupRandomResizedCrop(size)
    i, j, h, w = get_params(0, H, W, module.scale, module.ratio)

    out = resized_crop_group(img_group, i, j, h, w, size)
    out = jax.block_until_ready(out)

    ref = _reference(img_group, i, j, h, w, size)
    assert out.shape == (N, C, size, size)
    # bf16 operands -> loose tolerance vs the f32 reference.
    assert jnp.allclose(out, ref.astype(out.dtype), atol=5e-2, rtol=5e-2), (
        float(jnp.max(jnp.abs(out - ref))))

    print("KERNEL_OK")
</pallas_src>

<mosaic_0001>
module attributes {stable_mosaic.version = 11 : i64} {
  func.func @_resize_group_kernel(%arg0: i32, %arg1: memref<4x16x16xbf16, #tpu.memory_space<vmem>>, %arg2: memref<16x8xbf16, #tpu.memory_space<vmem>>, %arg3: memref<8x16xbf16, #tpu.memory_space<vmem>>, %arg4: memref<4x8x8xf32, #tpu.memory_space<vmem>>) attributes {dimension_semantics = [#tpu.dimension_semantics<parallel>], iteration_bounds = array<i64: 2>, scalar_prefetch = 0 : i64, scratch_operands = 0 : i64, tpu.core_type = #tpu.core_type<tc>, window_params = [{transform_indices = @transform_0, window_bounds = array<i64: 4, 16, 16>}, {pipeline_mode = #tpu.pipeline_mode<synchronous>, transform_indices = @transform_1, window_bounds = array<i64: 16, 8>}, {pipeline_mode = #tpu.pipeline_mode<synchronous>, transform_indices = @transform_2, window_bounds = array<i64: 8, 16>}, {transform_indices = @transform_3, window_bounds = array<i64: 4, 8, 8>}]} {
    %c0 = arith.constant 0 : index
    %c0_0 = arith.constant 0 : index
    %c0_1 = arith.constant 0 : index
    %0 = vector.load %arg1[%c0, %c0_0, %c0_1] : memref<4x16x16xbf16, #tpu.memory_space<vmem>>, vector<4x16x16xbf16>
    %1 = vector.shape_cast %0 : vector<4x16x16xbf16> to vector<64x16xbf16>
    %c0_2 = arith.constant 0 : index
    %c0_3 = arith.constant 0 : index
    %2 = vector.load %arg2[%c0_2, %c0_3] : memref<16x8xbf16, #tpu.memory_space<vmem>>, vector<16x8xbf16>
    %cst = arith.constant dense<0.000000e+00> : vector<64x8xf32>
    %3 = tpu.matmul %1, %2, %cst {dimension_numbers = #tpu.dot_dimension_numbers<[1], [0], [0], [1], [0, 0, 1, 1], [], []>} : vector<64x16xbf16>, vector<16x8xbf16>, vector<64x8xf32> -> vector<64x8xf32>
    %4 = vector.shape_cast %3 : vector<64x8xf32> to vector<4x16x8xf32>
    %5 = arith.truncf %4 : vector<4x16x8xf32> to vector<4x16x8xbf16>
    %c0_4 = arith.constant 0 : index
    %c0_5 = arith.constant 0 : index
    %6 = vector.load %arg3[%c0_4, %c0_5] : memref<8x16xbf16, #tpu.memory_space<vmem>>, vector<8x16xbf16>
    %7 = vector.extract_strided_slice %5 {offsets = [0, 0, 0], sizes = [1, 16, 8], strides = [1, 1, 1]} : vector<4x16x8xbf16> to vector<1x16x8xbf16>
    %8 = vector.shape_cast %7 : vector<1x16x8xbf16> to vector<16x8xbf16>
    %cst_6 = arith.constant dense<0.000000e+00> : vector<8x8xf32>
    %9 = tpu.matmul %6, %8, %cst_6 {dimension_numbers = #tpu.dot_dimension_numbers<[1], [0], [0], [1], [0, 0, 1, 1], [], []>} : vector<8x16xbf16>, vector<16x8xbf16>, vector<8x8xf32> -> vector<8x8xf32>
    %c0_7 = arith.constant 0 : index
    %c0_8 = arith.constant 0 : index
    %c0_9 = arith.constant 0 : index
    %10 = vector.load %arg4[%c0_7, %c0_8, %c0_9] : memref<4x8x8xf32, #tpu.memory_space<vmem>>, vector<1x8x8xf32>
    %11 = vector.shape_cast %10 : vector<1x8x8xf32> to vector<8x8xf32>
    %12 = vector.shape_cast %9 : vector<8x8xf32> to vector<1x8x8xf32>
    tpu.vector_store %arg4[%c0_7, %c0_8, %c0_9], %12 {strides = array<i32>} : memref<4x8x8xf32, #tpu.memory_space<vmem>>, vector<1x8x8xf32>,
    %13 = vector.extract_strided_slice %5 {offsets = [1, 0, 0], sizes = [1, 16, 8], strides = [1, 1, 1]} : vector<4x16x8xbf16> to vector<1x16x8xbf16>
    %14 = vector.shape_cast %13 : vector<1x16x8xbf16> to vector<16x8xbf16>
    %cst_10 = arith.constant dense<0.000000e+00> : vector<8x8xf32>
    %15 = tpu.matmul %6, %14, %cst_10 {dimension_numbers = #tpu.dot_dimension_numbers<[1], [0], [0], [1], [0, 0, 1, 1], [], []>} : vector<8x16xbf16>, vector<16x8xbf16>, vector<8x8xf32> -> vector<8x8xf32>
    %c1 = arith.constant 1 : index
    %c0_11 = arith.constant 0 : index
    %c0_12 = arith.constant 0 : index
    %16 = vector.load %arg4[%c1, %c0_11, %c0_12] : memref<4x8x8xf32, #tpu.memory_space<vmem>>, vector<1x8x8xf32>
    %17 = vector.shape_cast %16 : vector<1x8x8xf32> to vector<8x8xf32>
    %18 = vector.shape_cast %15 : vector<8x8xf32> to vector<1x8x8xf32>
    tpu.vector_store %arg4[%c1, %c0_11, %c0_12], %18 {strides = array<i32>} : memref<4x8x8xf32, #tpu.memory_space<vmem>>, vector<1x8x8xf32>,
    %19 = vector.extract_strided_slice %5 {offsets = [2, 0, 0], sizes = [1, 16, 8], strides = [1, 1, 1]} : vector<4x16x8xbf16> to vector<1x16x8xbf16>
    %20 = vector.shape_cast %19 : vector<1x16x8xbf16> to vector<16x8xbf16>
    %cst_13 = arith.constant dense<0.000000e+00> : vector<8x8xf32>
    %21 = tpu.matmul %6, %20, %cst_13 {dimension_numbers = #tpu.dot_dimension_numbers<[1], [0], [0], [1], [0, 0, 1, 1], [], []>} : vector<8x16xbf16>, vector<16x8xbf16>, vector<8x8xf32> -> vector<8x8xf32>
    %c2 = arith.constant 2 : index
    %c0_14 = arith.constant 0 : index
    %c0_15 = arith.constant 0 : index
    %22 = vector.load %arg4[%c2, %c0_14, %c0_15] : memref<4x8x8xf32, #tpu.memory_space<vmem>>, vector<1x8x8xf32>
    %23 = vector.shape_cast %22 : vector<1x8x8xf32> to vector<8x8xf32>
    %24 = vector.shape_cast %21 : vector<8x8xf32> to vector<1x8x8xf32>
    tpu.vector_store %arg4[%c2, %c0_14, %c0_15], %24 {strides = array<i32>} : memref<4x8x8xf32, #tpu.memory_space<vmem>>, vector<1x8x8xf32>,
    %25 = vector.extract_strided_slice %5 {offsets = [3, 0, 0], sizes = [1, 16, 8], strides = [1, 1, 1]} : vector<4x16x8xbf16> to vector<1x16x8xbf16>
    %26 = vector.shape_cast %25 : vector<1x16x8xbf16> to vector<16x8xbf16>
    %cst_16 = arith.constant dense<0.000000e+00> : vector<8x8xf32>
    %27 = tpu.matmul %6, %26, %cst_16 {dimension_numbers = #tpu.dot_dimension_numbers<[1], [0], [0], [1], [0, 0, 1, 1], [], []>} : vector<8x16xbf16>, vector<16x8xbf16>, vector<8x8xf32> -> vector<8x8xf32>
    %c3 = arith.constant 3 : index
    %c0_17 = arith.constant 0 : index
    %c0_18 = arith.constant 0 : index
    %28 = vector.load %arg4[%c3, %c0_17, %c0_18] : memref<4x8x8xf32, #tpu.memory_space<vmem>>, vector<1x8x8xf32>
    %29 = vector.shape_cast %28 : vector<1x8x8xf32> to vector<8x8xf32>
    %30 = vector.shape_cast %27 : vector<8x8xf32> to vector<1x8x8xf32>
    tpu.vector_store %arg4[%c3, %c0_17, %c0_18], %30 {strides = array<i32>} : memref<4x8x8xf32, #tpu.memory_space<vmem>>, vector<1x8x8xf32>,
    return
  }
  func.func @transform_0(%arg0: i32) -> (i32, i32, i32) {
    %c0_i32 = arith.constant 0 : i32
    %c0_i32_0 = arith.constant 0 : i32
    %c0_i32_1 = arith.constant 0 : i32
    return %arg0, %c0_i32, %c0_i32_0 : i32, i32, i32
  }
  func.func @transform_1(%arg0: i32) -> (i32, i32) {
    %c0_i32 = arith.constant 0 : i32
    %c0_i32_0 = arith.constant 0 : i32
    %c0_i32_1 = arith.constant 0 : i32
    return %c0_i32, %c0_i32_0 : i32, i32
  }
  func.func @transform_2(%arg0: i32) -> (i32, i32) {
    %c0_i32 = arith.constant 0 : i32
    %c0_i32_0 = arith.constant 0 : i32
    %c0_i32_1 = arith.constant 0 : i32
    return %c0_i32, %c0_i32_0 : i32, i32
  }
  func.func @transform_3(%arg0: i32) -> (i32, i32, i32) {
    %c0_i32 = arith.constant 0 : i32
    %c0_i32_0 = arith.constant 0 : i32
    %c0_i32_1 = arith.constant 0 : i32
    return %arg0, %c0_i32, %c0_i32_0 : i32, i32, i32
  }
}

</mosaic_0001>

<llo_original>
// kernel: tpu_custom_call.1
$region0: #{tpu_custom_call.1}
  #allocation0 [shape = 'u32[]', space=smem, size = 0x4, offset = 0x4, fixed_abs, tag = 'smem constant byte address 0x4 - core index']
  #allocation1 [shape = 'u32[144,128]{1,0:T(1,128)}', space=vmem, size = 0x12000, scoped, tag = 'internal scratch']
  %s0 = inlined_call_operand.hbm [shape: bf16[8,16,16], index: 0, kind: input, shape index: {}]
  %s1 = inlined_call_operand.vmem [shape: bf16[16,8], index: 1, kind: input, shape index: {}]
  %s2 = inlined_call_operand.vmem [shape: bf16[8,16], index: 2, kind: input, shape index: {}]
  %s3 = inlined_call_operand.hbm [shape: f32[8,8,8], index: 3, kind: output, shape index: {}]
  %s4 = sld [smem:[#allocation0]]
  $region49: #{tpu_custom_call.1} parent=0
    _
  %s6 = ssub.s32 1, %s4
  %s7 = scalar_select 0, %s6, %s4
  $region1: #{tpu_custom_call.1} parent=0
    #allocation2 [shape = 'u8[32768]{0}', space=vmem, size = 0x8000, scoped, tag = 'input window, operand 0']
    #allocation3 [shape = 's32[2]{0}', space=sflag, size = 0x8, scoped, tag = 'scoped memory for tpu_custom_call.1']
    #allocation4 [shape = 's32[2]{0}', space=sflag, size = 0x8, scoped, tag = 'scoped memory for tpu_custom_call.1']
    #allocation5 [shape = 'u8[32768]{0}', space=vmem, size = 0x8000, scoped, tag = 'output window, operand 0']
    %8 = vsyncpa [#allocation3], 0
    %s9 = scalar_lea.sflag [#allocation3], 1
    %10 = vsyncpa %s9, 0
    %11 = vsyncpa [#allocation4], 0
    %s12 = scalar_lea.sflag [#allocation4], 1
    %13 = vsyncpa %s12, 0
    loop: start=0, step=1, limit=4
    $region2: #{tpu_custom_call.1} parent=1 // loop_pre_header
      _
    $region3: #{tpu_custom_call.1} parent=1 // loop_header
      %s15 = sphi 0, %s19
      %p16 = scmp.ge.s32.totalorder %s15, 4
      %s25 = sphi 0, %s27
      %s28 = sphi 0, %s25
      %s29 = sphi 0, %s28
      %s45 = sphi 0, %s29
      %s49 = sphi 0, %s49
      %s51 = sphi 0, %s49
      %s52 = sphi 0, %s51
      %s66 = sphi 0, %s52
      %s70 = sphi 0, %s70
      %s72 = sphi 0, %s70
      %s73 = sphi 0, %s72
      %s87 = sphi 0, %s73
      %s93 = sphi 0, %s95
      %s96 = sphi 0, %s93
      %s97 = sphi 0, %s96
      %s113 = sphi 0, %s97
    $region4: #{tpu_custom_call.1} parent=1 // loop_header_branch
      %18 = sbr.rel (%p16) target = $region8
    $region5: #{tpu_custom_call.1} parent=1 // loop_body
      %s20 = ssub.s32 %s15, 1
      %s21 = ssub.s32 %s15, 2
      %s22 = sadd.s32 %s15, 1
      %s23 = ssub.s32 %s15, %s22
      %p24 = scmp.eq.s32.totalorder %s23, 0
      %s26 = sadd.s32 %s25, 1
      %s27 = scalar_select %p24, %s25, %s26
      %p30 = pneg %p24
      %p31 = scmp.eq.s32.totalorder %s15, 1
      %p32 = por %p30, %p31
      %p33 = scmp.ne.s32.totalorder %s25, %s28
      %p34 = scmp.eq.s32.totalorder %s15, 0
      %p35 = por %p33, %p34
      %p36 = scmp.ne.s32.totalorder %s25, %s28
      %p37 = scmp.eq.s32.totalorder %s20, 1
      %p38 = por %p36, %p37
      %p39 = scmp.ne.s32.totalorder %s28, %s29
      %p40 = scmp.eq.s32.totalorder %s20, 0
      %p41 = por %p39, %p40
      %p42 = scmp.ne.s32.totalorder %s28, %s29
      %p43 = scmp.eq.s32.totalorder %s21, 1
      %p44 = por %p42, %p43
      %p46 = scmp.ne.s32.totalorder %s29, %s45
      %p47 = scmp.eq.s32.totalorder %s21, 0
      %p48 = por %p46, %p47
      %s50 = sadd.s32 %s49, 1
      %p53 = scmp.eq.s32.totalorder %s15, 1
      %p54 = scmp.ne.s32.totalorder %s49, %s51
      %p55 = scmp.eq.s32.totalorder %s15, 0
      %p56 = por %p54, %p55
      %p57 = scmp.ne.s32.totalorder %s49, %s51
      %p58 = scmp.eq.s32.totalorder %s20, 1
      %p59 = por %p57, %p58
      %p60 = scmp.ne.s32.totalorder %s51, %s52
      %p61 = scmp.eq.s32.totalorder %s20, 0
      %p62 = por %p60, %p61
      %p63 = scmp.ne.s32.totalorder %s51, %s52
      %p64 = scmp.eq.s32.totalorder %s21, 1
      %p65 = por %p63, %p64
      %p67 = scmp.ne.s32.totalorder %s52, %s66
      %p68 = scmp.eq.s32.totalorder %s21, 0
      %p69 = por %p67, %p68
      %s71 = sadd.s32 %s70, 1
      %p74 = scmp.eq.s32.totalorder %s15, 1
      %p75 = scmp.ne.s32.totalorder %s70, %s72
      %p76 = scmp.eq.s32.totalorder %s15, 0
      %p77 = por %p75, %p76
      %p78 = scmp.ne.s32.totalorder %s70, %s72
      %p79 = scmp.eq.s32.totalorder %s20, 1
      %p80 = por %p78, %p79
      %p81 = scmp.ne.s32.totalorder %s72, %s73
      %p82 = scmp.eq.s32.totalorder %s20, 0
      %p83 = por %p81, %p82
      %p84 = scmp.ne.s32.totalorder %s72, %s73
      %p85 = scmp.eq.s32.totalorder %s21, 1
      %p86 = por %p84, %p85
      %p88 = scmp.ne.s32.totalorder %s73, %s87
      %p89 = scmp.eq.s32.totalorder %s21, 0
      %p90 = por %p88, %p89
      %s91 = ssub.s32 %s15, %s22
      %p92 = scmp.eq.s32.totalorder %s91, 0
      %s94 = sadd.s32 %s93, 1
      %s95 = scalar_select %p92, %s93, %s94
      %p98 = pneg %p92
      %p99 = scmp.eq.s32.totalorder %s15, 1
      %p100 = por %p98, %p99
      %p101 = scmp.ne.s32.totalorder %s93, %s96
      %p102 = scmp.eq.s32.totalorder %s15, 0
      %p103 = por %p101, %p102
      %p104 = scmp.ne.s32.totalorder %s93, %s96
      %p105 = scmp.eq.s32.totalorder %s20, 1
      %p106 = por %p104, %p105
      %p107 = scmp.ne.s32.totalorder %s96, %s97
      %p108 = scmp.eq.s32.totalorder %s20, 0
      %p109 = por %p107, %p108
      %p110 = scmp.ne.s32.totalorder %s96, %s97
      %p111 = scmp.eq.s32.totalorder %s21, 1
      %p112 = por %p110, %p111
      %p114 = scmp.ne.s32.totalorder %s97, %s113
      %p115 = scmp.eq.s32.totalorder %s21, 0
      %p116 = por %p114, %p115
      %p117 = scmp.le.s32.totalorder 1, %s15
      %p118 = scmp.lt.s32.totalorder %s15, 3
      %p119 = pnand %p117, %p118
      %p120 = pneg %p119
      // Predicated region
      $region9: #{tpu_custom_call.1} parent=5 // pred_check
        _
      $region10: #{tpu_custom_call.1} parent=5 // pred_check_branch
        %122 = sbr.rel (%p119) target = $region12
      $region11: #{tpu_custom_call.1} parent=5 // pred_region
        %s123 = ssub.s32 %s15, 1
        // Predicated region
        $region13: #{tpu_custom_call.1} parent=11 // pred_check
          %p124 = pneg %p62
        $region14: #{tpu_custom_call.1} parent=11 // pred_check_branch
          %126 = sbr.rel (%p124) target = $region16
        $region15: #{tpu_custom_call.1} parent=11 // pred_region
          _
        $region16: #{tpu_custom_call.1} parent=11 // pred_fallthru
          _
        // Predicated region
        $region17: #{tpu_custom_call.1} parent=11 // pred_check
          %p127 = pneg %p83
        $region18: #{tpu_custom_call.1} parent=11 // pred_check_branch
          %129 = sbr.rel (%p127) target = $region20
        $region19: #{tpu_custom_call.1} parent=11 // pred_region
          _
        $region20: #{tpu_custom_call.1} parent=11 // pred_fallthru
          _
      $region12: #{tpu_custom_call.1} parent=5 // pred_fallthru
        _
      %p130 = scmp.lt.s32.totalorder %s15, 2
      // Predicated region
      $region21: #{tpu_custom_call.1} parent=5 // pred_check
        %p131 = pneg %p130
      $region22: #{tpu_custom_call.1} parent=5 // pred_check_branch
        %133 = sbr.rel (%p131) target = $region24
      $region23: #{tpu_custom_call.1} parent=5 // pred_region
        // Predicated region
        $region25: #{tpu_custom_call.1} parent=23 // pred_check
          %p134 = pneg %p35
        $region26: #{tpu_custom_call.1} parent=23 // pred_check_branch
          %136 = sbr.rel (%p134) target = $region28
        $region27: #{tpu_custom_call.1} parent=23 // pred_region
          %s137 = sand.u32 %s25, 1
          %s138 = scalar_lea.sflag [#allocation3], %s137
          %s139 = sand.u32 %s25, 1
          %s140 = smul.addr %s139, 32
          %s141 = scalar_lea.vmem [#allocation2], %s140
          %s142 = smul.u32 4, %s15
          %s144 = ssub.s32 512, 512
          %145 = vsyncadd %s138, %s144
          %s146 = smul.addr %s142, 2
          %s147 = smul.addr %s146, 64
          %s148 = scalar_lea.hbm %s0, %s147
          %s149 = sshll.u32 %s141, 4
          %s150 = int_to_ptr.vmem [resolvable:$true] %s149
          %155 = dma.hbm_to_vmem [thread:$0]  %s148, 512, %s150, %s138, 64, 64, 4
        $region28: #{tpu_custom_call.1} parent=23 // pred_fallthru
          _
      $region24: #{tpu_custom_call.1} parent=5 // pred_fallthru
        _
      %p156 = scmp.le.s32.totalorder 1, %s15
      %p157 = scmp.lt.s32.totalorder %s15, 3
      %p158 = pnand %p156, %p157
      %p159 = pneg %p158
      // Predicated region
      $region29: #{tpu_custom_call.1} parent=5 // pred_check
        _
      $region30: #{tpu_custom_call.1} parent=5 // pred_check_branch
        %161 = sbr.rel (%p158) target = $region32
      $region31: #{tpu_custom_call.1} parent=5 // pred_region
        %s162 = ssub.s32 %s15, 1
        %s163 = sand.u32 %s28, 1
        %s164 = scalar_lea.sflag [#allocation3], %s163
        %s165 = sand.u32 %s28, 1
        %s166 = smul.addr %s165, 32
        %s167 = scalar_lea.vmem [#allocation2], %s166
        // Predicated region
        $region33: #{tpu_custom_call.1} parent=31 // pred_check
          %p168 = pneg %p41
        $region34: #{tpu_custom_call.1} parent=31 // pred_check_branch
          %170 = sbr.rel (%p168) target = $region36
        $region35: #{tpu_custom_call.1} parent=31 // pred_region
          %171 = dma.done %s164, 512
        $region36: #{tpu_custom_call.1} parent=31 // pred_fallthru
          _
        %s172 = sand.u32 %s28, 1
        %s173 = scalar_lea.sflag [#allocation3], %s172
        %s174 = sand.u32 %s28, 1
        %s175 = smul.addr %s174, 32
        %s176 = scalar_lea.vmem [#allocation2], %s175
        %p177 = pneg %p41
        %p178 = pneg %p38
        %p179 = pneg %p62
        %p180 = pneg %p59
        %p181 = pneg %p83
        %p182 = pneg %p80
        %p183 = pneg %p109
        %p184 = pneg %p106
        %s185 = sand.u32 %s96, 1
        %s186 = scalar_lea.sflag [#allocation4], %s185
        %s187 = sand.u32 %s96, 1
        %s188 = smul.addr %s187, 32
        %s189 = scalar_lea.vmem [#allocation5], %s188
        %s190 = smul.u32 4, %s20
        %s191 = smul.u32 4, %s20
        %v193 = vld [vmem:[%s167] sm:$0xf]
        %v194 = vld [vmem:[%s167 + $0x4] sm:$0xf]
        %v195 = vld [vmem:[%s167 + $0x8] sm:$0xf]
        %v196 = vld [vmem:[%s167 + $0xc] sm:$0xf]
        %v197 = vld [vmem:[%s167 + $0x10] sm:$0xf]
        %v198 = vld [vmem:[%s167 + $0x14] sm:$0xf]
        %v199 = vld [vmem:[%s167 + $0x18] sm:$0xf]
        %v200 = vld [vmem:[%s167 + $0x1c] sm:$0xf]
        %v201 = vld [vmem:[%s1] sm:$0xf]
        %v202 = vld [vmem:[%s1 + $0x4] sm:$0xf]
        %v211 = vunpack.c.l.b16 %v193
        %v212 = vunpack.c.l.b16 %v194
        %v213 = vunpack.c.l.b16 %v195
        %v214 = vunpack.c.l.b16 %v196
        %v215 = vunpack.c.l.b16 %v197
        %v216 = vunpack.c.l.b16 %v198
        %v217 = vunpack.c.l.b16 %v199
        %v218 = vunpack.c.l.b16 %v200
        %v219 = vpack.c.b16 %v212, %v211
        %v220 = vpack.c.b16 %v214, %v213
        %v221 = vpack.c.b16 %v216, %v215
        %v222 = vpack.c.b16 %v218, %v217
        %v225 = vunpack.c.l.b16 %v201
        %v226 = vunpack.c.l.b16 %v202
        %v227 = vpack.c.b16 %v226, %v225
        %vm229 = vcmask 130048
        %v231 = vsel %vm229, %v219, 0
        %v234 = vsel %vm229, %v220, 0
        %v237 = vsel %vm229, %v221, 0
        %v240 = vsel %vm229, %v222, 0
        %242 = vmatprep.subr.bf16.mxu0 0
        %243 = vmatpush1.bf16.msra.mxu0 %v227
        %244 = vmatprep.subr.bf16.mxu0 0
        %245 = vmatpush1.bf16.msra.mxu0 0
        %246 = vmatprep.subr.bf16.mxu0 0
        %247 = vmatpush1.bf16.msra.mxu0 0
        %248 = vmatprep.subr.bf16.mxu0 0
        %249 = vmatpush1.bf16.msra.mxu0 0
        %250 = vmatprep.subr.bf16.mxu0 0
        %251 = vmatpush1.bf16.msra.mxu0 0
        %252 = vmatprep.subr.bf16.mxu0 0
        %253 = vmatpush1.bf16.msra.mxu0 0
        %254 = vmatprep.subr.bf16.mxu0 0
        %255 = vmatpush1.bf16.msra.mxu0 0
        %256 = vmatprep.subr.bf16.mxu0 0
        %257 = vmatpush1.bf16.msra.mxu0 0
        %258 = vmatprep.subr.bf16.mxu0 0
        %259 = vmatpush1.bf16.msra.mxu0 0
        %260 = vmatprep.subr.bf16.mxu0 0
        %261 = vmatpush1.bf16.msra.mxu0 0
        %262 = vmatprep.subr.bf16.mxu0 0
        %263 = vmatpush1.bf16.msra.mxu0 0
        %264 = vmatprep.subr.bf16.mxu0 0
        %265 = vmatpush1.bf16.msra.mxu0 0
        %266 = vmatprep.subr.bf16.mxu0 0
        %267 = vmatpush1.bf16.msra.mxu0 0
        %268 = vmatprep.subr.bf16.mxu0 0
        %269 = vmatpush1.bf16.msra.mxu0 0
        %270 = vmatprep.subr.bf16.mxu0 0
        %271 = vmatpush1.bf16.msra.mxu0 0
        %272 = vmatprep.subr.bf16.mxu0 0
        %273 = vmatpush1.bf16.msra.mxu0 0
        %274 = vmatprep.mubr.bf16.mxu0 0
        %275 = vmatmul.mubr.bf16.gmra.mrb[0].mxu0 %v231
        %v276 = vpop.f32.mrb[0].mxu0
        %v277 = vadd.f32 0.0, %v276
        %v278 = vpop.f32.mrb[0].mxu0
        %v279 = vpop.f32.mrb[0].mxu0
        %v280 = vadd.f32 0.0, %v279
        %v281 = vpop.f32.mrb[0].mxu0
        %282 = vmatprep.mubr.bf16.mxu0 0
        %283 = vmatmul.mubr.bf16.gmra.mrb[0].mxu0 %v234
        %v284 = vpop.f32.mrb[0].mxu0
        %v285 = vadd.f32 0.0, %v284
        %v286 = vpop.f32.mrb[0].mxu0
        %v287 = vpop.f32.mrb[0].mxu0
        %v288 = vadd.f32 0.0, %v287
        %v289 = vpop.f32.mrb[0].mxu0
        %290 = vmatprep.mubr.bf16.mxu0 0
        %291 = vmatmul.mubr.bf16.gmra.mrb[0].mxu0 %v237
        %v292 = vpop.f32.mrb[0].mxu0
        %v293 = vadd.f32 0.0, %v292
        %v294 = vpop.f32.mrb[0].mxu0
        %v295 = vpop.f32.mrb[0].mxu0
        %v296 = vadd.f32 0.0, %v295
        %v297 = vpop.f32.mrb[0].mxu0
        %298 = vmatprep.mubr.bf16.mxu0 0
        %299 = vmatmul.mubr.bf16.gmra.mrb[0].mxu0 %v240
        %v300 = vpop.f32.mrb[0].mxu0
        %v301 = vadd.f32 0.0, %v300
        %v302 = vpop.f32.mrb[0].mxu0
        %v303 = vpop.f32.mrb[0].mxu0
        %v304 = vadd.f32 0.0, %v303
        %v305 = vpop.f32.mrb[0].mxu0
        %306 = vdwg.mxu0
        %v307 = vpack.c.bf16 %v280, %v277
        %v308 = vpack.c.bf16 %v288, %v285
        %v309 = vpack.c.bf16 %v296, %v293
        %v310 = vpack.c.bf16 %v304, %v301
        %v311 = vld [vmem:[%s2] sm:$0xf]
        %v313 = vsel %vm229, %v311, 0
        %315 = vmatprep.subr.bf16.mxu0 0
        %316 = vmatpush1.bf16.msra.mxu0 %v307
        %317 = vmatprep.subr.bf16.mxu0 0
        %318 = vmatpush1.bf16.msra.mxu0 0
        %319 = vmatprep.subr.bf16.mxu0 0
        %320 = vmatpush1.bf16.msra.mxu0 0
        %321 = vmatprep.subr.bf16.mxu0 0
        %322 = vmatpush1.bf16.msra.mxu0 0
        %323 = vmatprep.subr.bf16.mxu0 0
        %324 = vmatpush1.bf16.msra.mxu0 0
        %325 = vmatprep.subr.bf16.mxu0 0
        %326 = vmatpush1.bf16.msra.mxu0 0
        %327 = vmatprep.subr.bf16.mxu0 0
        %328 = vmatpush1.bf16.msra.mxu0 0
        %329 = vmatprep.subr.bf16.mxu0 0
        %330 = vmatpush1.bf16.msra.mxu0 0
        %331 = vmatprep.subr.bf16.mxu0 0
        %332 = vmatpush1.bf16.msra.mxu0 0
        %333 = vmatprep.subr.bf16.mxu0 0
        %334 = vmatpush1.bf16.msra.mxu0 0
        %335 = vmatprep.subr.bf16.mxu0 0
        %336 = vmatpush1.bf16.msra.mxu0 0
        %337 = vmatprep.subr.bf16.mxu0 0
        %338 = vmatpush1.bf16.msra.mxu0 0
        %339 = vmatprep.subr.bf16.mxu0 0
        %340 = vmatpush1.bf16.msra.mxu0 0
        %341 = vmatprep.subr.bf16.mxu0 0
        %342 = vmatpush1.bf16.msra.mxu0 0
        %343 = vmatprep.subr.bf16.mxu0 0
        %344 = vmatpush1.bf16.msra.mxu0 0
        %345 = vmatprep.subr.bf16.mxu0 0
        %346 = vmatpush1.bf16.msra.mxu0 0
        %347 = vmatprep.mubr.bf16.mxu0 0
        %348 = vmatmul.mubr.bf16.gmra.mrb[0].mxu0 %v313
        %v349 = vpop.f32.mrb[0].mxu0
        %v350 = vadd.f32 0.0, %v349
        %v351 = vpop.f32.mrb[0].mxu0
        %v352 = vpop.f32.mrb[0].mxu0
        %v353 = vpop.f32.mrb[0].mxu0
        %354 = vdwg.mxu0
        %vm355 = vcmask 64512
        %356 = vst.msk [vmem:[%s189] sm:$0xff] %vm355, %v350
        %357 = vmatprep.subr.bf16.mxu0 0
        %358 = vmatpush1.bf16.msra.mxu0 %v308
        %359 = vmatprep.subr.bf16.mxu0 0
        %360 = vmatpush1.bf16.msra.mxu0 0
        %361 = vmatprep.subr.bf16.mxu0 0
        %362 = vmatpush1.bf16.msra.mxu0 0
        %363 = vmatprep.subr.bf16.mxu0 0
        %364 = vmatpush1.bf16.msra.mxu0 0
        %365 = vmatprep.subr.bf16.mxu0 0
        %366 = vmatpush1.bf16.msra.mxu0 0
        %367 = vmatprep.subr.bf16.mxu0 0
        %368 = vmatpush1.bf16.msra.mxu0 0
        %369 = vmatprep.subr.bf16.mxu0 0
        %370 = vmatpush1.bf16.msra.mxu0 0
        %371 = vmatprep.subr.bf16.mxu0 0
        %372 = vmatpush1.bf16.msra.mxu0 0
        %373 = vmatprep.subr.bf16.mxu0 0
        %374 = vmatpush1.bf16.msra.mxu0 0
        %375 = vmatprep.subr.bf16.mxu0 0
        %376 = vmatpush1.bf16.msra.mxu0 0
        %377 = vmatprep.subr.bf16.mxu0 0
        %378 = vmatpush1.bf16.msra.mxu0 0
        %379 = vmatprep.subr.bf16.mxu0 0
        %380 = vmatpush1.bf16.msra.mxu0 0
        %381 = vmatprep.subr.bf16.mxu0 0
        %382 = vmatpush1.bf16.msra.mxu0 0
        %383 = vmatprep.subr.bf16.mxu0 0
        %384 = vmatpush1.bf16.msra.mxu0 0
        %385 = vmatprep.subr.bf16.mxu0 0
        %386 = vmatpush1.bf16.msra.mxu0 0
        %387 = vmatprep.subr.bf16.mxu0 0
        %388 = vmatpush1.bf16.msra.mxu0 0
        %389 = vmatprep.mubr.bf16.mxu0 0
        %390 = vmatmul.mubr.bf16.gmra.mrb[0].mxu0 %v313
        %v391 = vpop.f32.mrb[0].mxu0
        %v392 = vadd.f32 0.0, %v391
        %v393 = vpop.f32.mrb[0].mxu0
        %v394 = vpop.f32.mrb[0].mxu0
        %v395 = vpop.f32.mrb[0].mxu0
        %396 = vdwg.mxu0
        %s397 = scalar_lea.vmem %s189, 8 [#allocation5]
        %398 = vst.msk [vmem:[%s397] sm:$0xff] %vm355, %v392
        %399 = vmatprep.subr.bf16.mxu0 0
        %400 = vmatpush1.bf16.msra.mxu0 %v309
        %401 = vmatprep.subr.bf16.mxu0 0
        %402 = vmatpush1.bf16.msra.mxu0 0
        %403 = vmatprep.subr.bf16.mxu0 0
        %404 = vmatpush1.bf16.msra.mxu0 0
        %405 = vmatprep.subr.bf16.mxu0 0
        %406 = vmatpush1.bf16.msra.mxu0 0
        %407 = vmatprep.subr.bf16.mxu0 0
        %408 = vmatpush1.bf16.msra.mxu0 0
        %409 = vmatprep.subr.bf16.mxu0 0
        %410 = vmatpush1.bf16.msra.mxu0 0
        %411 = vmatprep.subr.bf16.mxu0 0
        %412 = vmatpush1.bf16.msra.mxu0 0
        %413 = vmatprep.subr.bf16.mxu0 0
        %414 = vmatpush1.bf16.msra.mxu0 0
        %415 = vmatprep.subr.bf16.mxu0 0
        %416 = vmatpush1.bf16.msra.mxu0 0
        %417 = vmatprep.subr.bf16.mxu0 0
        %418 = vmatpush1.bf16.msra.mxu0 0
        %419 = vmatprep.subr.bf16.mxu0 0
        %420 = vmatpush1.bf16.msra.mxu0 0
        %421 = vmatprep.subr.bf16.mxu0 0
        %422 = vmatpush1.bf16.msra.mxu0 0
        %423 = vmatprep.subr.bf16.mxu0 0
        %424 = vmatpush1.bf16.msra.mxu0 0
        %425 = vmatprep.subr.bf16.mxu0 0
        %426 = vmatpush1.bf16.msra.mxu0 0
        %427 = vmatprep.subr.bf16.mxu0 0
        %428 = vmatpush1.bf16.msra.mxu0 0
        %429 = vmatprep.subr.bf16.mxu0 0
        %430 = vmatpush1.bf16.msra.mxu0 0
        %431 = vmatprep.mubr.bf16.mxu0 0
        %432 = vmatmul.mubr.bf16.gmra.mrb[0].mxu0 %v313
        %v433 = vpop.f32.mrb[0].mxu0
        %v434 = vadd.f32 0.0, %v433
        %v435 = vpop.f32.mrb[0].mxu0
        %v436 = vpop.f32.mrb[0].mxu0
        %v437 = vpop.f32.mrb[0].mxu0
        %438 = vdwg.mxu0
        %s439 = scalar_lea.vmem %s189, 16 [#allocation5]
        %440 = vst.msk [vmem:[%s439] sm:$0xff] %vm355, %v434
        %441 = vmatprep.subr.bf16.mxu0 0
        %442 = vmatpush1.bf16.msra.mxu0 %v310
        %443 = vmatprep.subr.bf16.mxu0 0
        %444 = vmatpush1.bf16.msra.mxu0 0
        %445 = vmatprep.subr.bf16.mxu0 0
        %446 = vmatpush1.bf16.msra.mxu0 0
        %447 = vmatprep.subr.bf16.mxu0 0
        %448 = vmatpush1.bf16.msra.mxu0 0
        %449 = vmatprep.subr.bf16.mxu0 0
        %450 = vmatpush1.bf16.msra.mxu0 0
        %451 = vmatprep.subr.bf16.mxu0 0
        %452 = vmatpush1.bf16.msra.mxu0 0
        %453 = vmatprep.subr.bf16.mxu0 0
        %454 = vmatpush1.bf16.msra.mxu0 0
        %455 = vmatprep.subr.bf16.mxu0 0
        %456 = vmatpush1.bf16.msra.mxu0 0
        %457 = vmatprep.subr.bf16.mxu0 0
        %458 = vmatpush1.bf16.msra.mxu0 0
        %459 = vmatprep.subr.bf16.mxu0 0
        %460 = vmatpush1.bf16.msra.mxu0 0
        %461 = vmatprep.subr.bf16.mxu0 0
        %462 = vmatpush1.bf16.msra.mxu0 0
        %463 = vmatprep.subr.bf16.mxu0 0
        %464 = vmatpush1.bf16.msra.mxu0 0
        %465 = vmatprep.subr.bf16.mxu0 0
        %466 = vmatpush1.bf16.msra.mxu0 0
        %467 = vmatprep.subr.bf16.mxu0 0
        %468 = vmatpush1.bf16.msra.mxu0 0
        %469 = vmatprep.subr.bf16.mxu0 0
        %470 = vmatpush1.bf16.msra.mxu0 0
        %471 = vmatprep.subr.bf16.mxu0 0
        %472 = vmatpush1.bf16.msra.mxu0 0
        %473 = vmatprep.mubr.bf16.mxu0 0
        %474 = vmatmul.mubr.bf16.gmra.mrb[0].mxu0 %v313
        %v475 = vpop.f32.mrb[0].mxu0
        %v476 = vadd.f32 0.0, %v475
        %v477 = vpop.f32.mrb[0].mxu0
        %v478 = vpop.f32.mrb[0].mxu0
        %v479 = vpop.f32.mrb[0].mxu0
        %480 = vdwg.mxu0
        %s481 = scalar_lea.vmem %s189, 24 [#allocation5]
        %482 = vst.msk [vmem:[%s481] sm:$0xff] %vm355, %v476
        %s483 = sand.u32 %s96, 1
        %s484 = scalar_lea.sflag [#allocation4], %s483
        %s485 = sand.u32 %s96, 1
        %s486 = smul.addr %s485, 32
        %s487 = scalar_lea.vmem [#allocation5], %s486
        // Predicated region
        $region37: #{tpu_custom_call.1} parent=31 // pred_check
          %p488 = pneg %p106
        $region38: #{tpu_custom_call.1} parent=31 // pred_check_branch
          %490 = sbr.rel (%p488) target = $region40
        $region39: #{tpu_custom_call.1} parent=31 // pred_region
          %s491 = smul.u32 4, %s20
          %s493 = ssub.s32 512, 512
          %494 = vsyncadd %s484, %s493
          %s495 = smul.addr %s491, 128
          %s496 = scalar_lea.hbm %s3, %s495
          %s497 = sshll.u32 %s487, 4
          %s498 = int_to_ptr.vmem [resolvable:$true] %s497
          %503 = dma.vmem_to_hbm [thread:$0]  %s498, 512, %s496, %s484, 128, 128, 8
        $region40: #{tpu_custom_call.1} parent=31 // pred_fallthru
          _
      $region32: #{tpu_custom_call.1} parent=5 // pred_fallthru
        _
      %p504 = scmp.le.s32.totalorder 2, %s15
      // Predicated region
      $region41: #{tpu_custom_call.1} parent=5 // pred_check
        %p505 = pneg %p504
      $region42: #{tpu_custom_call.1} parent=5 // pred_check_branch
        %507 = sbr.rel (%p505) target = $region44
      $region43: #{tpu_custom_call.1} parent=5 // pred_region
        %s508 = ssub.s32 %s15, 2
        // Predicated region
        $region45: #{tpu_custom_call.1} parent=43 // pred_check
          %p509 = pneg %p112
        $region46: #{tpu_custom_call.1} parent=43 // pred_check_branch
          %511 = sbr.rel (%p509) target = $region48
        $region47: #{tpu_custom_call.1} parent=43 // pred_region
          %s512 = sand.u32 %s97, 1
          %s513 = scalar_lea.sflag [#allocation4], %s512
          %s514 = sand.u32 %s97, 1
          %s515 = smul.addr %s514, 32
          %s516 = scalar_lea.vmem [#allocation5], %s515
          %517 = dma.done %s513, 512
        $region48: #{tpu_custom_call.1} parent=43 // pred_fallthru
          _
      $region44: #{tpu_custom_call.1} parent=5 // pred_fallthru
        _
    $region6: #{tpu_custom_call.1} parent=1 // loop_footer
      %s19 = sadd.s32 1, %s15
    $region7: #{tpu_custom_call.1} parent=1 // loop_footer_branch
      %14 = sbr.rel target = $region3
    $region8: #{tpu_custom_call.1} parent=1 // loop_exit
      _
    %518 = vsyncpa [#allocation3], 1
    %s519 = scalar_lea.sflag [#allocation3], 1
    %520 = vsyncpa %s519, 1
    %521 = vsyncpa [#allocation4], 1
    %s522 = scalar_lea.sflag [#allocation4], 1
    %523 = vsyncpa %s522, 1

</llo_original>
